<compile_context>
chip_gen: v7x
topology: tpu7x:2x2x1
jax: 0.10.0
libtpu: 0.0.40
codegen_flags: <defaults>
</compile_context>

<pallas_src>
import functools

import jax
import jax.numpy as jnp
from jax.experimental import pallas as pl
from jax.experimental.pallas import tpu as pltpu


# ----------------------------------------------------------------------------
# Plain-JAX glue: farthest point sampling + ball-query grouping.
# TODO(synk): FPS / ball-query are data-dependent argmax / sort / gather loops
# with no clean Pallas equivalent; they stay in plain JAX (XLA).
# ----------------------------------------------------------------------------

def square_distance(src, dst):
    # src [B,N,C], dst [B,M,C] -> [B,N,M]
    dist = -2.0 * jnp.einsum("bnc,bmc->bnm", src, dst)
    dist = dist + jnp.sum(src ** 2, -1)[:, :, None]
    dist = dist + jnp.sum(dst ** 2, -1)[:, None, :]
    return dist


def index_points(points, idx):
    # points [B,N,C], idx [B,...] -> [B,...,C]
    B = points.shape[0]
    batch = jnp.arange(B).reshape((B,) + (1,) * (idx.ndim - 1))
    return points[batch, idx]


def farthest_point_sample(xyz, npoint, key):
    # torch version seeds with randint; we use a deterministic jax.random key.
    B, N, _ = xyz.shape
    farthest = jax.random.randint(key, (B,), 0, N, dtype=jnp.int32)
    distance = jnp.full((B, N), 1e10, dtype=jnp.float32)
    centroids = jnp.zeros((B, npoint), dtype=jnp.int32)
    batch_idx = jnp.arange(B)

    def body(i, carry):
        centroids, distance, farthest = carry
        centroids = centroids.at[:, i].set(farthest)
        centroid = xyz[batch_idx, farthest, :][:, None, :]          # [B,1,3]
        dist = jnp.sum((xyz - centroid) ** 2, -1)                   # [B,N]
        distance = jnp.minimum(distance, dist)
        farthest = jnp.argmax(distance, -1).astype(jnp.int32)
        return centroids, distance, farthest

    centroids, _, _ = jax.lax.fori_loop(0, npoint, body,
                                        (centroids, distance, farthest))
    return centroids


def query_ball_point(radius, nsample, xyz, new_xyz):
    # NOTE: if a query ball is empty, index N is clamped to N-1 by JAX gather
    # (torch would error in the same degenerate case).
    B, N, _ = xyz.shape
    S = new_xyz.shape[1]
    group_idx = jnp.broadcast_to(jnp.arange(N, dtype=jnp.int32), (B, S, N))
    sqrdists = square_distance(new_xyz, xyz)
    group_idx = jnp.where(sqrdists > radius ** 2, N, group_idx)
    group_idx = jnp.sort(group_idx, axis=-1)[:, :, :nsample]
    group_first = jnp.broadcast_to(group_idx[:, :, 0:1], (B, S, nsample))
    group_idx = jnp.where(group_idx == N, group_first, group_idx)
    return group_idx


def sample_and_group(npoint, radius, nsample, xyz, points, key):
    new_xyz = index_points(xyz, farthest_point_sample(xyz, npoint, key))  # [B,S,3]
    idx = query_ball_point(radius, nsample, xyz, new_xyz)                 # [B,S,K]
    grouped_xyz = index_points(xyz, idx)                                  # [B,S,K,3]
    grouped_xyz_norm = grouped_xyz - new_xyz[:, :, None, :]
    if points is not None:
        grouped_points = index_points(points, idx)                        # [B,S,K,D]
        new_points = jnp.concatenate([grouped_xyz_norm, grouped_points], axis=-1)
    else:
        new_points = grouped_xyz_norm
    return new_xyz, new_points                                            # [B,S,3], [B,S,K,3+D]


# ----------------------------------------------------------------------------
# Pallas kernels
# ----------------------------------------------------------------------------

def _layer0_stats_kernel(x_ref, w_ref, sum_ref, sq_ref):
    """Per-channel sum / sum-of-squares of the layer-0 conv output z = x @ W.

    Only layer 0 needs this dedicated reduction over the (smallest) raw input;
    every later layer gets its statistics from the previous fused layer kernel.
    Padded rows of x are exactly zero, so they contribute 0 to both
    accumulators; the wrapper divides by the TRUE position count.
    """
    @pl.when(pl.program_id(0) == 0)
    def _():
        sum_ref[...] = jnp.zeros_like(sum_ref)
        sq_ref[...] = jnp.zeros_like(sq_ref)

    tg, kp, cin = x_ref.shape
    x = x_ref[...].reshape(tg * kp, cin)
    z = jnp.dot(x, w_ref[...], preferred_element_type=jnp.float32)
    sum_ref[...] += jnp.sum(z, axis=0, keepdims=True)
    sq_ref[...] += jnp.sum(z * z, axis=0, keepdims=True)


def _fused_layer_kernel(x_ref, w_ref, scale_ref, shift_ref, wn_ref,
                        out_ref, sum_ref, sq_ref, *,
                        k_valid, g_valid, mask_k, mask_g):
    """conv (MXU) + folded BN affine + ReLU for one non-last layer, PLUS the
    per-channel sum / sum-of-squares of the NEXT layer's conv output
    y = h @ W_next (accumulated while h is still in VMEM), so the next layer
    never re-reads the activations for its BatchNorm statistics.
    """
    @pl.when(pl.program_id(0) == 0)
    def _():
        sum_ref[...] = jnp.zeros_like(sum_ref)
        sq_ref[...] = jnp.zeros_like(sq_ref)

    tg, kp, cin = x_ref.shape
    cout = w_ref.shape[1]

    x = x_ref[...].reshape(tg * kp, cin)
    z = jnp.dot(x, w_ref[...], preferred_element_type=jnp.float32)
    h = jnp.maximum(z * scale_ref[...] + shift_ref[...], 0.0)     # BN + ReLU
    h = h.reshape(tg, kp, cout)

    # Padded rows must be exactly zero: they feed the next layer's statistics
    # and (eventually) the max-pool.  Masks are gated statically and fused.
    if mask_k or mask_g:
        valid = None
        if mask_k:
            kidx = jax.lax.broadcasted_iota(jnp.int32, (tg, kp, 1), 1)
            valid = kidx < k_valid
        if mask_g:
            g0 = pl.program_id(0) * tg
            gidx = jax.lax.broadcasted_iota(jnp.int32, (tg, kp, 1), 0) + g0
            gok = gidx < g_valid
            valid = gok if valid is None else (valid & gok)
        h = jnp.where(valid, h, 0.0)

    hb = h.astype(out_ref.dtype)                                  # bf16 writeback
    out_ref[...] = hb

    # Next-layer conv-output moments from the SAME bf16 values the next layer
    # will read back, so the derived BN statistics match a two-pass computation.
    y = jnp.dot(hb.reshape(tg * kp, cout), wn_ref[...],
                preferred_element_type=jnp.float32)
    sum_ref[...] += jnp.sum(y, axis=0, keepdims=True)
    sq_ref[...] += jnp.sum(y * y, axis=0, keepdims=True)


def _pool_layer_kernel(x_ref, w_ref, scale_ref, shift_ref, out_ref, *,
                       k_valid, mask_k):
    """Last layer: conv + folded BN affine + ReLU + max over the K axis.

    Only the K mask is needed: ReLU output >= 0, so zeroed padded rows never
    win the max; G-padded output rows are sliced away by the wrapper.
    """
    tg, kp, cin = x_ref.shape
    cout = w_ref.shape[1]

    x = x_ref[...].reshape(tg * kp, cin)
    z = jnp.dot(x, w_ref[...], preferred_element_type=jnp.float32)
    h = jnp.maximum(z * scale_ref[...] + shift_ref[...], 0.0)
    h = h.reshape(tg, kp, cout)
    if mask_k:
        kidx = jax.lax.broadcasted_iota(jnp.int32, (tg, kp, 1), 1)
        h = jnp.where(kidx < k_valid, h, 0.0)
    out_ref[...] = jnp.max(h, axis=1).astype(out_ref.dtype)       # [tg, cout]


# ----------------------------------------------------------------------------
# Tile-size / VMEM model
# ----------------------------------------------------------------------------

def _round_up(x, m):
    return ((x + m - 1) // m) * m


def _vmem_capacity_bytes():
    try:
        return int(pltpu.get_tpu_info().vmem_capacity_bytes)
    except Exception:
        return 64 * 1024 * 1024        # conservative default (v7x per-TensorCore)


def _choose_tile_g(G, K_pad, c_in, c_out_pad, c_next_pad, cap_bytes, pooled):
    """Largest group-axis tile (of the form 16*2^k, so all layers share one
    G_pad) whose working set fits ~60% of this chip's VMEM, with a minimum MXU
    M-dimension of 512 rows when the budget allows it."""
    cin_lane = _round_up(max(c_in, 1), 128)         # physical lanes, not logical dim
    per_g = (2 * 2 * K_pad * cin_lane               # bf16 input tile, double-buffered
             + 2 * 4 * K_pad * c_out_pad)           # f32 z/h temporaries (~2 live)
    if pooled:
        per_g += 2 * 4 * c_out_pad                  # f32 pooled output, double-buffered
    else:
        per_g += 2 * 2 * K_pad * c_out_pad          # bf16 output tile, double-buffered
        per_g += 4 * K_pad * c_next_pad             # f32 y = h @ W_next temporary
    fixed = (2 * 2 * cin_lane * c_out_pad           # resident weight
             + 2 * 2 * c_out_pad * max(c_next_pad, 1)
             + 16 * max(c_out_pad, max(c_next_pad, 1))
             + (2 << 20))                           # Mosaic internal scratch headroom
    budget = int(cap_bytes * 0.60)
    cand = max((budget - fixed) // max(per_g, 1), 16)
    tile = 16
    while tile * 2 <= cand and tile * 2 <= 2048:
        tile *= 2
    # Keep the MXU M-dim (tile*K_pad) >= 512 rows without blowing the budget.
    while tile * K_pad < 512 and fixed + 2 * tile * per_g <= int(cap_bytes * 0.80):
        tile *= 2
    g_cap = 16
    while g_cap < G:
        g_cap *= 2                                  # never tile past the problem size
    tile = min(tile, g_cap)
    return tile, fixed + tile * per_g


def _vmem_limit(est_bytes, cap_bytes):
    # Per-layer limit: computed need plus headroom, never past ~85% of physical.
    return int(min(cap_bytes * 0.85, max(est_bytes * 3 // 2 + (8 << 20), 32 << 20)))


# ----------------------------------------------------------------------------
# Wrapper: MLP (conv + BN + ReLU)* + max over K, one pallas_call per layer.
# ----------------------------------------------------------------------------

def pointnet_sa_mlp_maxpool(new_points, params, eps=1e-5):
    """new_points: [B, S, K, C_in] -> [B, S, C_last] via tiled Pallas kernels."""
    B, S, K, Cin = new_points.shape
    G = B * S
    count = float(G * K)                       # true #positions for BN statistics
    n_layers = len(params)

    K_pad = _round_up(K, 16)                   # bf16 packs 2 rows / sublane
    Cin_pad = _round_up(Cin, 8)                # sublane-friendly contraction dim
    c_pads = [_round_up(p["w"].shape[1], 128) for p in params]
    c_ins = [Cin_pad] + c_pads[:-1]            # per-layer (padded) input channels

    cap = _vmem_capacity_bytes()               # 128 MiB v5e/v6e, 64 MiB v7x

    # Per-layer group-axis tiles (all of the form 16*2^k -> one shared G_pad).
    tiles, ests = [], []
    for li in range(n_layers):
        pooled = (li == n_layers - 1)
        c_next = 0 if pooled else c_pads[li + 1]
        t, est = _choose_tile_g(G, K_pad, c_ins[li], c_pads[li], c_next, cap, pooled)
        tiles.append(t)
        ests.append(est)
    t_stats, est_stats = _choose_tile_g(G, K_pad, Cin_pad, c_pads[0], 0, cap, True)

    G_pad = _round_up(G, max(tiles + [t_stats]))

    # Zero-padded bf16 activations [G_pad, K_pad, Cin_pad]; padded rows stay zero.
    h = new_points.reshape(G, K, Cin).astype(jnp.bfloat16)
    h = jnp.pad(h, ((0, G_pad - G), (0, K_pad - K), (0, Cin_pad - Cin)))

    # Zero-padded bf16 weights for every layer (layer i's kernel also needs W_{i+1}).
    Ws = []
    for li, p in enumerate(params):
        w = jnp.zeros((c_ins[li], c_pads[li]), jnp.bfloat16)
        w = w.at[:p["w"].shape[0], :p["w"].shape[1]].set(p["w"].astype(jnp.bfloat16))
        Ws.append(w)

    # ---- layer-0 BN statistics (the only extra pass; raw input is the smallest
    #      tensor).  NOTE: the Conv2d bias shifts the mean only and cancels
    #      exactly inside training-mode BatchNorm, so it is folded away. --------
    num_t0 = G_pad // t_stats
    s_sum, s_sq = pl.pallas_call(
        _layer0_stats_kernel,
        out_shape=(jax.ShapeDtypeStruct((1, c_pads[0]), jnp.float32),
                   jax.ShapeDtypeStruct((1, c_pads[0]), jnp.float32)),
        grid=(num_t0,),
        in_specs=[pl.BlockSpec((t_stats, K_pad, Cin_pad), lambda g: (g, 0, 0)),
                  pl.BlockSpec((Cin_pad, c_pads[0]), lambda g: (0, 0))],
        out_specs=(pl.BlockSpec((1, c_pads[0]), lambda g: (0, 0)),
                   pl.BlockSpec((1, c_pads[0]), lambda g: (0, 0))),
        compiler_params=pltpu.CompilerParams(
            dimension_semantics=("arbitrary",),
            vmem_limit_bytes=_vmem_limit(est_stats, cap)),
    )(h, Ws[0])

    for li, p in enumerate(params):
        cout = p["w"].shape[1]
        cout_pad = c_pads[li]
        cin_l = c_ins[li]
        pooled = (li == n_layers - 1)
        tg = tiles[li]
        num_tiles = G_pad // tg

        gamma = jnp.zeros((cout_pad,), jnp.float32).at[:cout].set(p["gamma"].reshape(-1))
        beta = jnp.zeros((cout_pad,), jnp.float32).at[:cout].set(p["beta"].reshape(-1))

        # Fold the batch statistics into a single per-channel FMA.
        # var = E[z^2] - E[z]^2 can cancel when |mean| >> std; the clamp + eps
        # bound the damage for post-ReLU-scale activations (see review note).
        mean = s_sum[0] / count
        var = jnp.maximum(s_sq[0] / count - mean * mean, 0.0)   # biased var (torch BN train)
        inv = jax.lax.rsqrt(var + eps)
        scale = (gamma * inv).reshape(1, cout_pad)
        shift = (beta - mean * gamma * inv).reshape(1, cout_pad)

        x_spec = pl.BlockSpec((tg, K_pad, cin_l), lambda g: (g, 0, 0))
        w_spec = pl.BlockSpec((cin_l, cout_pad), lambda g: (0, 0))
        v_spec = pl.BlockSpec((1, cout_pad), lambda g: (0, 0))
        vlim = _vmem_limit(ests[li], cap)

        if pooled:
            # Final layer: conv + BN + ReLU + max over K.  No accumulators ->
            # the grid axis can be megacore-parallel (helps v7x).
            h = pl.pallas_call(
                functools.partial(_pool_layer_kernel,
                                  k_valid=K, mask_k=(K_pad > K)),
                out_shape=jax.ShapeDtypeStruct((G_pad, cout_pad), jnp.float32),
                grid=(num_tiles,),
                in_specs=[x_spec, w_spec, v_spec, v_spec],
                out_specs=pl.BlockSpec((tg, cout_pad), lambda g: (g, 0)),
                compiler_params=pltpu.CompilerParams(
                    dimension_semantics=("parallel",),
                    vmem_limit_bytes=vlim),
            )(h, Ws[li], scale, shift)
        else:
            # Non-last layer: one fused call produces the activations AND the
            # next layer's BN statistics.  The resident moment accumulators make
            # the grid axis a reduction ("arbitrary"); a per-core partial-output
            # variant would re-enable v7x megacore here if ever needed.
            c_next_pad = c_pads[li + 1]
            vn_spec = pl.BlockSpec((1, c_next_pad), lambda g: (0, 0))
            wn_spec = pl.BlockSpec((cout_pad, c_next_pad), lambda g: (0, 0))
            h, s_sum, s_sq = pl.pallas_call(
                functools.partial(_fused_layer_kernel,
                                  k_valid=K, g_valid=G,
                                  mask_k=(K_pad > K), mask_g=(G_pad > G)),
                out_shape=(jax.ShapeDtypeStruct((G_pad, K_pad, cout_pad), jnp.bfloat16),
                           jax.ShapeDtypeStruct((1, c_next_pad), jnp.float32),
                           jax.ShapeDtypeStruct((1, c_next_pad), jnp.float32)),
                grid=(num_tiles,),
                in_specs=[x_spec, w_spec, v_spec, v_spec, wn_spec],
                out_specs=(pl.BlockSpec((tg, K_pad, cout_pad), lambda g: (g, 0, 0)),
                           vn_spec, vn_spec),
                compiler_params=pltpu.CompilerParams(
                    dimension_semantics=("arbitrary",),
                    vmem_limit_bytes=vlim),
            )(h, Ws[li], scale, shift, Ws[li + 1])

    return h[:G, :params[-1]["w"].shape[1]].reshape(B, S, -1)


# ----------------------------------------------------------------------------
# Module-equivalent wrapper + deterministic parameter init
# ----------------------------------------------------------------------------

def init_params(key, in_channel, mlp):
    """Conv2d(last, out, 1) weights stored as [C_in, C_out]; BN gamma=1, beta=0.

    The conv bias is generated for module parity but cancels exactly inside
    training-mode BatchNorm, so the kernels never read it.
    """
    params = []
    last = in_channel
    for out_ch in mlp:
        key, k1, k2 = jax.random.split(key, 3)
        bound = 1.0 / float(last) ** 0.5                      # torch Conv2d-style bound
        w = jax.random.uniform(k1, (last, out_ch), jnp.float32, -bound, bound)
        b = jax.random.uniform(k2, (1, out_ch), jnp.float32, -bound, bound)
        params.append(dict(w=w, b=b,
                           gamma=jnp.ones((1, out_ch), jnp.float32),
                           beta=jnp.zeros((1, out_ch), jnp.float32)))
        last = out_ch
    return params


def pointnet_set_abstraction(xyz, points, params, *, npoint, radius, nsample,
                             group_all, fps_key):
    if group_all:
        B, N, C = xyz.shape
        new_xyz = jnp.zeros((B, 1, C), xyz.dtype)
        grouped = xyz[:, None, :, :]
        if points is not None:
            new_points = jnp.concatenate([grouped, points[:, None, :, :]], axis=-1)
        else:
            new_points = grouped
    else:
        new_xyz, new_points = sample_and_group(npoint, radius, nsample,
                                               xyz, points, fps_key)
    feats = pointnet_sa_mlp_maxpool(new_points, params)      # [B, S, C_last]
    return new_xyz, feats


if __name__ == "__main__":
    # Small deterministic example consistent with the module's forward:
    #   xyz [B, N, 3], points [B, N, D], in_channel = 3 + D
    B, N, D = 2, 16, 4
    npoint, nsample, radius = 8, 8, 0.4
    mlp = [16, 32]
    in_channel = 3 + D

    key = jax.random.PRNGKey(0)
    kx, kp, kf, kparam = jax.random.split(key, 4)
    xyz = jax.random.uniform(kx, (B, N, 3), dtype=jnp.float32)
    points = jax.random.normal(kp, (B, N, D), dtype=jnp.float32)
    params = init_params(kparam, in_channel, mlp)

    new_xyz, new_feats = pointnet_set_abstraction(
        xyz, points, params,
        npoint=npoint, radius=radius, nsample=nsample,
        group_all=False, fps_key=kf)

    jax.block_until_ready((new_xyz, new_feats))
    assert new_xyz.shape == (B, npoint, 3)
    assert new_feats.shape == (B, npoint, mlp[-1])
    assert bool(jnp.all(jnp.isfinite(new_feats)))
    print("KERNEL_OK")
</pallas_src>

<mosaic_0001>
module attributes {stable_mosaic.version = 11 : i64} {
  func.func @_layer0_stats_kernel(%arg0: i32, %arg1: memref<16x16x8xbf16, #tpu.memory_space<vmem>>, %arg2: memref<8x128xbf16, #tpu.memory_space<vmem>>, %arg3: memref<1x128xf32, #tpu.memory_space<vmem>>, %arg4: memref<1x128xf32, #tpu.memory_space<vmem>>) attributes {dimension_semantics = [#tpu.dimension_semantics<arbitrary>], iteration_bounds = array<i64: 1>, scalar_prefetch = 0 : i64, scratch_operands = 0 : i64, tpu.core_type = #tpu.core_type<tc>, window_params = [{transform_indices = @transform_0, window_bounds = array<i64: 16, 16, 8>}, {pipeline_mode = #tpu.pipeline_mode<synchronous>, transform_indices = @transform_1, window_bounds = array<i64: 8, 128>}, {pipeline_mode = #tpu.pipeline_mode<synchronous>, transform_indices = @transform_2, window_bounds = array<i64: 1, 128>}, {pipeline_mode = #tpu.pipeline_mode<synchronous>, transform_indices = @transform_3, window_bounds = array<i64: 1, 128>}]} {
    %c0_i32 = arith.constant 0 : i32
    %0 = arith.cmpi eq, %arg0, %c0_i32 : i32
    %1 = arith.extui %0 : i1 to i32
    %c0_i32_0 = arith.constant 0 : i32
    %2 = arith.cmpi ne, %1, %c0_i32_0 : i32
    scf.if %2 {
      %cst_15 = arith.constant 0.000000e+00 : f32
      %18 = vector.broadcast %cst_15 : f32 to vector<1x128xf32>
      %c0_16 = arith.constant 0 : index
      %c0_17 = arith.constant 0 : index
      %19 = vector.load %arg3[%c0_16, %c0_17] : memref<1x128xf32, #tpu.memory_space<vmem>>, vector<1x128xf32>
      tpu.vector_store %arg3[%c0_16, %c0_17], %18 {strides = array<i32>} : memref<1x128xf32, #tpu.memory_space<vmem>>, vector<1x128xf32>,
      %cst_18 = arith.constant 0.000000e+00 : f32
      %20 = vector.broadcast %cst_18 : f32 to vector<1x128xf32>
      %c0_19 = arith.constant 0 : index
      %c0_20 = arith.constant 0 : index
      %21 = vector.load %arg4[%c0_19, %c0_20] : memref<1x128xf32, #tpu.memory_space<vmem>>, vector<1x128xf32>
      tpu.vector_store %arg4[%c0_19, %c0_20], %20 {strides = array<i32>} : memref<1x128xf32, #tpu.memory_space<vmem>>, vector<1x128xf32>,
    } else {
    }
    %c0 = arith.constant 0 : index
    %c0_1 = arith.constant 0 : index
    %c0_2 = arith.constant 0 : index
    %3 = vector.load %arg1[%c0, %c0_1, %c0_2] : memref<16x16x8xbf16, #tpu.memory_space<vmem>>, vector<16x16x8xbf16>
    %4 = vector.shape_cast %3 : vector<16x16x8xbf16> to vector<256x8xbf16>
    %c0_3 = arith.constant 0 : index
    %c0_4 = arith.constant 0 : index
    %5 = vector.load %arg2[%c0_3, %c0_4] : memref<8x128xbf16, #tpu.memory_space<vmem>>, vector<8x128xbf16>
    %cst = arith.constant dense<0.000000e+00> : vector<256x128xf32>
    %6 = tpu.matmul %4, %5, %cst {dimension_numbers = #tpu.dot_dimension_numbers<[1], [0], [0], [1], [0, 0, 1, 1], [], []>} : vector<256x8xbf16>, vector<8x128xbf16>, vector<256x128xf32> -> vector<256x128xf32>
    %c0_5 = arith.constant 0 : index
    %c0_6 = arith.constant 0 : index
    %7 = vector.load %arg3[%c0_5, %c0_6] : memref<1x128xf32, #tpu.memory_space<vmem>>, vector<1x128xf32>
    %cst_7 = arith.constant dense<0.000000e+00> : vector<128xf32>
    %8 = vector.multi_reduction <add>, %6, %cst_7 [0] : vector<256x128xf32> to vector<128xf32>
    %9 = vector.shape_cast %8 : vector<128xf32> to vector<1x128xf32>
    %10 = arith.addf %7, %9 : vector<1x128xf32>
    %c0_8 = arith.constant 0 : index
    %c0_9 = arith.constant 0 : index
    %11 = vector.load %arg3[%c0_8, %c0_9] : memref<1x128xf32, #tpu.memory_space<vmem>>, vector<1x128xf32>
    tpu.vector_store %arg3[%c0_8, %c0_9], %10 {strides = array<i32>} : memref<1x128xf32, #tpu.memory_space<vmem>>, vector<1x128xf32>,
    %c0_10 = arith.constant 0 : index
    %c0_11 = arith.constant 0 : index
    %12 = vector.load %arg4[%c0_10, %c0_11] : memref<1x128xf32, #tpu.memory_space<vmem>>, vector<1x128xf32>
    %13 = arith.mulf %6, %6 : vector<256x128xf32>
    %cst_12 = arith.constant dense<0.000000e+00> : vector<128xf32>
    %14 = vector.multi_reduction <add>, %13, %cst_12 [0] : vector<256x128xf32> to vector<128xf32>
    %15 = vector.shape_cast %14 : vector<128xf32> to vector<1x128xf32>
    %16 = arith.addf %12, %15 : vector<1x128xf32>
    %c0_13 = arith.constant 0 : index
    %c0_14 = arith.constant 0 : index
    %17 = vector.load %arg4[%c0_13, %c0_14] : memref<1x128xf32, #tpu.memory_space<vmem>>, vector<1x128xf32>
    tpu.vector_store %arg4[%c0_13, %c0_14], %16 {strides = array<i32>} : memref<1x128xf32, #tpu.memory_space<vmem>>, vector<1x128xf32>,
    return
  }
  func.func @transform_0(%arg0: i32) -> (i32, i32, i32) {
    %c0_i32 = arith.constant 0 : i32
    %c0_i32_0 = arith.constant 0 : i32
    %c0_i32_1 = arith.constant 0 : i32
    return %arg0, %c0_i32, %c0_i32_0 : i32, i32, i32
  }
  func.func @transform_1(%arg0: i32) -> (i32, i32) {
    %c0_i32 = arith.constant 0 : i32
    %c0_i32_0 = arith.constant 0 : i32
    %c0_i32_1 = arith.constant 0 : i32
    return %c0_i32, %c0_i32_0 : i32, i32
  }
  func.func @transform_2(%arg0: i32) -> (i32, i32) {
    %c0_i32 = arith.constant 0 : i32
    %c0_i32_0 = arith.constant 0 : i32
    %c0_i32_1 = arith.constant 0 : i32
    return %c0_i32, %c0_i32_0 : i32, i32
  }
  func.func @transform_3(%arg0: i32) -> (i32, i32) {
    %c0_i32 = arith.constant 0 : i32
    %c0_i32_0 = arith.constant 0 : i32
    %c0_i32_1 = arith.constant 0 : i32
    return %c0_i32, %c0_i32_0 : i32, i32
  }
}

</mosaic_0001>

<llo_original>
// kernel: tpu_custom_call.1
$region0: #{tpu_custom_call.1}
  #allocation0 [shape = 'u32[]', space=smem, size = 0x4, offset = 0x4, fixed_abs, tag = 'smem constant byte address 0x4 - core index']
  #allocation1 [shape = 'u32[144,128]{1,0:T(1,128)}', space=vmem, size = 0x12000, scoped, tag = 'internal scratch']
  %s0 = inlined_call_operand.vmem [shape: bf16[16,16,8], index: 0, kind: input, shape index: {}]
  %s1 = inlined_call_operand.vmem [shape: bf16[8,128], index: 1, kind: input, shape index: {}]
  %s2 = inlined_call_operand.hbm [shape: f32[1,128], index: 2, kind: output, shape index: {0}]
  %s3 = inlined_call_operand.hbm [shape: f32[1,128], index: 3, kind: output, shape index: {1}]
  %4 = xla_tuple %s2, %s3
  %s5 = sld [smem:[#allocation0]]
  $region30: #{tpu_custom_call.1} parent=0
    _
  %s7 = ssub.s32 1, %s5
  %s8 = scalar_select 0, %s7, %s5
  $region1: #{tpu_custom_call.1} parent=0
    #allocation2 [shape = 'u8[512]{0}', space=vmem, size = 0x400, scoped, tag = 'output window, operand 0, single buffered']
    #allocation3 [shape = 's32[1]{0}', space=sflag, size = 0x4, scoped, tag = 'scoped memory for tpu_custom_call.1']
    #allocation4 [shape = 'u8[512]{0}', space=vmem, size = 0x400, scoped, tag = 'output window, operand 1, single buffered']
    #allocation5 [shape = 's32[1]{0}', space=sflag, size = 0x4, scoped, tag = 'scoped memory for tpu_custom_call.1']
    %9 = vsyncpa [#allocation3], 0
    %10 = vsyncpa [#allocation5], 0
    // Predicated region
    $region2: #{tpu_custom_call.1} parent=1 // pred_check
      _
    $region3: #{tpu_custom_call.1} parent=1 // pred_check_branch
      %12 = sbr.rel (0) target = $region5
    $region4: #{tpu_custom_call.1} parent=1 // pred_region
      _
    $region5: #{tpu_custom_call.1} parent=1 // pred_fallthru
      _
    // Predicated region
    $region6: #{tpu_custom_call.1} parent=1 // pred_check
      _
    $region7: #{tpu_custom_call.1} parent=1 // pred_check_branch
      %14 = sbr.rel (0) target = $region9
    $region8: #{tpu_custom_call.1} parent=1 // pred_region
      _
    $region9: #{tpu_custom_call.1} parent=1 // pred_fallthru
      _
    %p16 = scmp.eq.s32.totalorder 0, 0
    // Predicated region
    $region10: #{tpu_custom_call.1} parent=1 // pred_check
      %p17 = pneg %p16
    $region11: #{tpu_custom_call.1} parent=1 // pred_check_branch
      %19 = sbr.rel (%p17) target = $region13
    $region12: #{tpu_custom_call.1} parent=1 // pred_region
      %20 = vst [vmem:[#allocation2] sm:$0x1] 0.0
      %21 = vst [vmem:[#allocation4] sm:$0x1] 0.0
    $region13: #{tpu_custom_call.1} parent=1 // pred_fallthru
      _
    %v22 = vld [vmem:[%s0] sm:$0xf]
    %v23 = vld [vmem:[%s0 + $0x4] sm:$0xf]
    %v24 = vld [vmem:[%s0 + $0x8] sm:$0xf]
    %v25 = vld [vmem:[%s0 + $0xc] sm:$0xf]
    %v26 = vld [vmem:[%s0 + $0x10] sm:$0xf]
    %v27 = vld [vmem:[%s0 + $0x14] sm:$0xf]
    %v28 = vld [vmem:[%s0 + $0x18] sm:$0xf]
    %v29 = vld [vmem:[%s0 + $0x1c] sm:$0xf]
    %v30 = vld [vmem:[%s0 + $0x20] sm:$0xf]
    %v31 = vld [vmem:[%s0 + $0x24] sm:$0xf]
    %v32 = vld [vmem:[%s0 + $0x28] sm:$0xf]
    %v33 = vld [vmem:[%s0 + $0x2c] sm:$0xf]
    %v34 = vld [vmem:[%s0 + $0x30] sm:$0xf]
    %v35 = vld [vmem:[%s0 + $0x34] sm:$0xf]
    %v36 = vld [vmem:[%s0 + $0x38] sm:$0xf]
    %v37 = vld [vmem:[%s0 + $0x3c] sm:$0xf]
    %v38 = vld [vmem:[%s0 + $0x40] sm:$0xf]
    %v39 = vld [vmem:[%s0 + $0x44] sm:$0xf]
    %v40 = vld [vmem:[%s0 + $0x48] sm:$0xf]
    %v41 = vld [vmem:[%s0 + $0x4c] sm:$0xf]
    %v42 = vld [vmem:[%s0 + $0x50] sm:$0xf]
    %v43 = vld [vmem:[%s0 + $0x54] sm:$0xf]
    %v44 = vld [vmem:[%s0 + $0x58] sm:$0xf]
    %v45 = vld [vmem:[%s0 + $0x5c] sm:$0xf]
    %v46 = vld [vmem:[%s0 + $0x60] sm:$0xf]
    %v47 = vld [vmem:[%s0 + $0x64] sm:$0xf]
    %v48 = vld [vmem:[%s0 + $0x68] sm:$0xf]
    %v49 = vld [vmem:[%s0 + $0x6c] sm:$0xf]
    %v50 = vld [vmem:[%s0 + $0x70] sm:$0xf]
    %v51 = vld [vmem:[%s0 + $0x74] sm:$0xf]
    %v52 = vld [vmem:[%s0 + $0x78] sm:$0xf]
    %v53 = vld [vmem:[%s0 + $0x7c] sm:$0xf]
    %v54 = vld [vmem:[%s1] sm:$0xf]
    %v87 = vunpack.c.l.b16 %v22
    %v88 = vunpack.c.l.b16 %v23
    %v89 = vunpack.c.l.b16 %v24
    %v90 = vunpack.c.l.b16 %v25
    %v91 = vunpack.c.l.b16 %v26
    %v92 = vunpack.c.l.b16 %v27
    %v93 = vunpack.c.l.b16 %v28
    %v94 = vunpack.c.l.b16 %v29
    %v95 = vunpack.c.l.b16 %v30
    %v96 = vunpack.c.l.b16 %v31
    %v97 = vunpack.c.l.b16 %v32
    %v98 = vunpack.c.l.b16 %v33
    %v99 = vunpack.c.l.b16 %v34
    %v100 = vunpack.c.l.b16 %v35
    %v101 = vunpack.c.l.b16 %v36
    %v102 = vunpack.c.l.b16 %v37
    %v103 = vunpack.c.l.b16 %v38
    %v104 = vunpack.c.l.b16 %v39
    %v105 = vunpack.c.l.b16 %v40
    %v106 = vunpack.c.l.b16 %v41
    %v107 = vunpack.c.l.b16 %v42
    %v108 = vunpack.c.l.b16 %v43
    %v109 = vunpack.c.l.b16 %v44
    %v110 = vunpack.c.l.b16 %v45
    %v111 = vunpack.c.l.b16 %v46
    %v112 = vunpack.c.l.b16 %v47
    %v113 = vunpack.c.l.b16 %v48
    %v114 = vunpack.c.l.b16 %v49
    %v115 = vunpack.c.l.b16 %v50
    %v116 = vunpack.c.l.b16 %v51
    %v117 = vunpack.c.l.b16 %v52
    %v118 = vunpack.c.l.b16 %v53
    %v119 = vpack.c.b16 %v88, %v87
    %v120 = vpack.c.b16 %v90, %v89
    %v121 = vpack.c.b16 %v92, %v91
    %v122 = vpack.c.b16 %v94, %v93
    %v123 = vpack.c.b16 %v96, %v95
    %v124 = vpack.c.b16 %v98, %v97
    %v125 = vpack.c.b16 %v100, %v99
    %v126 = vpack.c.b16 %v102, %v101
    %v127 = vpack.c.b16 %v104, %v103
    %v128 = vpack.c.b16 %v106, %v105
    %v129 = vpack.c.b16 %v108, %v107
    %v130 = vpack.c.b16 %v110, %v109
    %v131 = vpack.c.b16 %v112, %v111
    %v132 = vpack.c.b16 %v114, %v113
    %v133 = vpack.c.b16 %v116, %v115
    %v134 = vpack.c.b16 %v118, %v117
    %vm135 = vcmask 64512
    %v137 = vsel %vm135, %v119, 0
    %v140 = vsel %vm135, %v120, 0
    %v143 = vsel %vm135, %v121, 0
    %v146 = vsel %vm135, %v122, 0
    %v149 = vsel %vm135, %v123, 0
    %v152 = vsel %vm135, %v124, 0
    %v155 = vsel %vm135, %v125, 0
    %v158 = vsel %vm135, %v126, 0
    %v161 = vsel %vm135, %v127, 0
    %v164 = vsel %vm135, %v128, 0
    %v167 = vsel %vm135, %v129, 0
    %v170 = vsel %vm135, %v130, 0
    %v173 = vsel %vm135, %v131, 0
    %v176 = vsel %vm135, %v132, 0
    %v179 = vsel %vm135, %v133, 0
    %v182 = vsel %vm135, %v134, 0
    %vm184 = vcmask 1043456
    %v186 = vsel %vm184, %v54, 0
    %188 = vmatprep.subr.bf16.mxu0 0
    %189 = vmatpush1.bf16.msra.mxu0 %v186
    %190 = vmatprep.subr.bf16.mxu0 0
    %191 = vmatpush1.bf16.msra.mxu0 0
    %192 = vmatprep.subr.bf16.mxu0 0
    %193 = vmatpush1.bf16.msra.mxu0 0
    %194 = vmatprep.subr.bf16.mxu0 0
    %195 = vmatpush1.bf16.msra.mxu0 0
    %196 = vmatprep.subr.bf16.mxu0 0
    %197 = vmatpush1.bf16.msra.mxu0 0
    %198 = vmatprep.subr.bf16.mxu0 0
    %199 = vmatpush1.bf16.msra.mxu0 0
    %200 = vmatprep.subr.bf16.mxu0 0
    %201 = vmatpush1.bf16.msra.mxu0 0
    %202 = vmatprep.subr.bf16.mxu0 0
    %203 = vmatpush1.bf16.msra.mxu0 0
    %204 = vmatprep.subr.bf16.mxu0 0
    %205 = vmatpush1.bf16.msra.mxu0 0
    %206 = vmatprep.subr.bf16.mxu0 0
    %207 = vmatpush1.bf16.msra.mxu0 0
    %208 = vmatprep.subr.bf16.mxu0 0
    %209 = vmatpush1.bf16.msra.mxu0 0
    %210 = vmatprep.subr.bf16.mxu0 0
    %211 = vmatpush1.bf16.msra.mxu0 0
    %212 = vmatprep.subr.bf16.mxu0 0
    %213 = vmatpush1.bf16.msra.mxu0 0
    %214 = vmatprep.subr.bf16.mxu0 0
    %215 = vmatpush1.bf16.msra.mxu0 0
    %216 = vmatprep.subr.bf16.mxu0 0
    %217 = vmatpush1.bf16.msra.mxu0 0
    %218 = vmatprep.subr.bf16.mxu0 0
    %219 = vmatpush1.bf16.msra.mxu0 0
    %220 = vmatprep.mubr.bf16.mxu0 0
    %221 = vmatmul.mubr.bf16.gmra.mrb[0].mxu0 %v137
    %v222 = vpop.f32.mrb[0].mxu0
    %v223 = vadd.f32 0.0, %v222
    %v224 = vpop.f32.mrb[0].mxu0
    %v225 = vpop.f32.mrb[0].mxu0
    %v226 = vadd.f32 0.0, %v225
    %v227 = vpop.f32.mrb[0].mxu0
    %228 = vmatprep.mubr.bf16.mxu0 0
    %229 = vmatmul.mubr.bf16.gmra.mrb[0].mxu0 %v140
    %v230 = vpop.f32.mrb[0].mxu0
    %v231 = vadd.f32 0.0, %v230
    %v232 = vpop.f32.mrb[0].mxu0
    %v233 = vpop.f32.mrb[0].mxu0
    %v234 = vadd.f32 0.0, %v233
    %v235 = vpop.f32.mrb[0].mxu0
    %236 = vmatprep.mubr.bf16.mxu0 0
    %237 = vmatmul.mubr.bf16.gmra.mrb[0].mxu0 %v143
    %v238 = vpop.f32.mrb[0].mxu0
    %v239 = vadd.f32 0.0, %v238
    %v240 = vpop.f32.mrb[0].mxu0
    %v241 = vpop.f32.mrb[0].mxu0
    %v242 = vadd.f32 0.0, %v241
    %v243 = vpop.f32.mrb[0].mxu0
    %244 = vmatprep.mubr.bf16.mxu0 0
    %245 = vmatmul.mubr.bf16.gmra.mrb[0].mxu0 %v146
    %v246 = vpop.f32.mrb[0].mxu0
    %v247 = vadd.f32 0.0, %v246
    %v248 = vpop.f32.mrb[0].mxu0
    %v249 = vpop.f32.mrb[0].mxu0
    %v250 = vadd.f32 0.0, %v249
    %v251 = vpop.f32.mrb[0].mxu0
    %252 = vmatprep.mubr.bf16.mxu0 0
    %253 = vmatmul.mubr.bf16.gmra.mrb[0].mxu0 %v149
    %v254 = vpop.f32.mrb[0].mxu0
    %v255 = vadd.f32 0.0, %v254
    %v256 = vpop.f32.mrb[0].mxu0
    %v257 = vpop.f32.mrb[0].mxu0
    %v258 = vadd.f32 0.0, %v257
    %v259 = vpop.f32.mrb[0].mxu0
    %260 = vmatprep.mubr.bf16.mxu0 0
    %261 = vmatmul.mubr.bf16.gmra.mrb[0].mxu0 %v152
    %v262 = vpop.f32.mrb[0].mxu0
    %v263 = vadd.f32 0.0, %v262
    %v264 = vpop.f32.mrb[0].mxu0
    %v265 = vpop.f32.mrb[0].mxu0
    %v266 = vadd.f32 0.0, %v265
    %v267 = vpop.f32.mrb[0].mxu0
    %268 = vmatprep.mubr.bf16.mxu0 0
    %269 = vmatmul.mubr.bf16.gmra.mrb[0].mxu0 %v155
    %v270 = vpop.f32.mrb[0].mxu0
    %v271 = vadd.f32 0.0, %v270
    %v272 = vpop.f32.mrb[0].mxu0
    %v273 = vpop.f32.mrb[0].mxu0
    %v274 = vadd.f32 0.0, %v273
    %v275 = vpop.f32.mrb[0].mxu0
    %276 = vmatprep.mubr.bf16.mxu0 0
    %277 = vmatmul.mubr.bf16.gmra.mrb[0].mxu0 %v158
    %v278 = vpop.f32.mrb[0].mxu0
    %v279 = vadd.f32 0.0, %v278
    %v280 = vpop.f32.mrb[0].mxu0
    %v281 = vpop.f32.mrb[0].mxu0
    %v282 = vadd.f32 0.0, %v281
    %v283 = vpop.f32.mrb[0].mxu0
    %284 = vmatprep.mubr.bf16.mxu0 0
    %285 = vmatmul.mubr.bf16.gmra.mrb[0].mxu0 %v161
    %v286 = vpop.f32.mrb[0].mxu0
    %v287 = vadd.f32 0.0, %v286
    %v288 = vpop.f32.mrb[0].mxu0
    %v289 = vpop.f32.mrb[0].mxu0
    %v290 = vadd.f32 0.0, %v289
    %v291 = vpop.f32.mrb[0].mxu0
    %292 = vmatprep.mubr.bf16.mxu0 0
    %293 = vmatmul.mubr.bf16.gmra.mrb[0].mxu0 %v164
    %v294 = vpop.f32.mrb[0].mxu0
    %v295 = vadd.f32 0.0, %v294
    %v296 = vpop.f32.mrb[0].mxu0
    %v297 = vpop.f32.mrb[0].mxu0
    %v298 = vadd.f32 0.0, %v297
    %v299 = vpop.f32.mrb[0].mxu0
    %300 = vmatprep.mubr.bf16.mxu0 0
    %301 = vmatmul.mubr.bf16.gmra.mrb[0].mxu0 %v167
    %v302 = vpop.f32.mrb[0].mxu0
    %v303 = vadd.f32 0.0, %v302
    %v304 = vpop.f32.mrb[0].mxu0
    %v305 = vpop.f32.mrb[0].mxu0
    %v306 = vadd.f32 0.0, %v305
    %v307 = vpop.f32.mrb[0].mxu0
    %308 = vmatprep.mubr.bf16.mxu0 0
    %309 = vmatmul.mubr.bf16.gmra.mrb[0].mxu0 %v170
    %v310 = vpop.f32.mrb[0].mxu0
    %v311 = vadd.f32 0.0, %v310
    %v312 = vpop.f32.mrb[0].mxu0
    %v313 = vpop.f32.mrb[0].mxu0
    %v314 = vadd.f32 0.0, %v313
    %v315 = vpop.f32.mrb[0].mxu0
    %316 = vmatprep.mubr.bf16.mxu0 0
    %317 = vmatmul.mubr.bf16.gmra.mrb[0].mxu0 %v173
    %v318 = vpop.f32.mrb[0].mxu0
    %v319 = vadd.f32 0.0, %v318
    %v320 = vpop.f32.mrb[0].mxu0
    %v321 = vpop.f32.mrb[0].mxu0
    %v322 = vadd.f32 0.0, %v321
    %v323 = vpop.f32.mrb[0].mxu0
    %324 = vmatprep.mubr.bf16.mxu0 0
    %325 = vmatmul.mubr.bf16.gmra.mrb[0].mxu0 %v176
    %v326 = vpop.f32.mrb[0].mxu0
    %v327 = vadd.f32 0.0, %v326
    %v328 = vpop.f32.mrb[0].mxu0
    %v329 = vpop.f32.mrb[0].mxu0
    %v330 = vadd.f32 0.0, %v329
    %v331 = vpop.f32.mrb[0].mxu0
    %332 = vmatprep.mubr.bf16.mxu0 0
    %333 = vmatmul.mubr.bf16.gmra.mrb[0].mxu0 %v179
    %v334 = vpop.f32.mrb[0].mxu0
    %v335 = vadd.f32 0.0, %v334
    %v336 = vpop.f32.mrb[0].mxu0
    %v337 = vpop.f32.mrb[0].mxu0
    %v338 = vadd.f32 0.0, %v337
    %v339 = vpop.f32.mrb[0].mxu0
    %340 = vmatprep.mubr.bf16.mxu0 0
    %341 = vmatmul.mubr.bf16.gmra.mrb[0].mxu0 %v182
    %v342 = vpop.f32.mrb[0].mxu0
    %v343 = vadd.f32 0.0, %v342
    %v344 = vpop.f32.mrb[0].mxu0
    %v345 = vpop.f32.mrb[0].mxu0
    %v346 = vadd.f32 0.0, %v345
    %v347 = vpop.f32.mrb[0].mxu0
    %348 = vdwg.mxu0
    %v349 = vld [vmem:[#allocation2] sm:$0x1]
    %v350 = vadd.f32 %v223, %v226
    %v351 = vadd.f32 %v350, %v231
    %v352 = vadd.f32 %v351, %v234
    %v353 = vadd.f32 %v352, %v239
    %v354 = vadd.f32 %v353, %v242
    %v355 = vadd.f32 %v354, %v247
    %v356 = vadd.f32 %v355, %v250
    %v357 = vadd.f32 %v356, %v255
    %v358 = vadd.f32 %v357, %v258
    %v359 = vadd.f32 %v358, %v263
    %v360 = vadd.f32 %v359, %v266
    %v361 = vadd.f32 %v360, %v271
    %v362 = vadd.f32 %v361, %v274
    %v363 = vadd.f32 %v362, %v279
    %v364 = vadd.f32 %v363, %v282
    %v365 = vadd.f32 %v364, %v287
    %v366 = vadd.f32 %v365, %v290
    %v367 = vadd.f32 %v366, %v295
    %v368 = vadd.f32 %v367, %v298
    %v369 = vadd.f32 %v368, %v303
    %v370 = vadd.f32 %v369, %v306
    %v371 = vadd.f32 %v370, %v311
    %v372 = vadd.f32 %v371, %v314
    %v373 = vadd.f32 %v372, %v319
    %v374 = vadd.f32 %v373, %v322
    %v375 = vadd.f32 %v374, %v327
    %v376 = vadd.f32 %v375, %v330
    %v377 = vadd.f32 %v376, %v335
    %v378 = vadd.f32 %v377, %v338
    %v379 = vadd.f32 %v378, %v343
    %v380 = vadd.f32 %v379, %v346
    %v381 = vrot.slane %v380, 4
    %v382 = vadd.f32 %v380, %v381
    %v383 = vrot.slane %v382, 2
    %v384 = vadd.f32 %v382, %v383
    %v385 = vrot.slane %v384, 1
    %v386 = vadd.f32 %v384, %v385
    %v387 = vadd.f32 %v349, %v386
    %388 = vst [vmem:[#allocation2] sm:$0x1] %v387
    %v389 = vld [vmem:[#allocation4] sm:$0x1]
    %v390 = vmul.f32 %v223, %v223
    %v391 = vmul.f32 %v226, %v226
    %v392 = vmul.f32 %v231, %v231
    %v393 = vmul.f32 %v234, %v234
    %v394 = vmul.f32 %v239, %v239
    %v395 = vmul.f32 %v242, %v242
    %v396 = vmul.f32 %v247, %v247
    %v397 = vmul.f32 %v250, %v250
    %v398 = vmul.f32 %v255, %v255
    %v399 = vmul.f32 %v258, %v258
    %v400 = vmul.f32 %v263, %v263
    %v401 = vmul.f32 %v266, %v266
    %v402 = vmul.f32 %v271, %v271
    %v403 = vmul.f32 %v274, %v274
    %v404 = vmul.f32 %v279, %v279
    %v405 = vmul.f32 %v282, %v282
    %v406 = vmul.f32 %v287, %v287
    %v407 = vmul.f32 %v290, %v290
    %v408 = vmul.f32 %v295, %v295
    %v409 = vmul.f32 %v298, %v298
    %v410 = vmul.f32 %v303, %v303
    %v411 = vmul.f32 %v306, %v306
    %v412 = vmul.f32 %v311, %v311
    %v413 = vmul.f32 %v314, %v314
    %v414 = vmul.f32 %v319, %v319
    %v415 = vmul.f32 %v322, %v322
    %v416 = vmul.f32 %v327, %v327
    %v417 = vmul.f32 %v330, %v330
    %v418 = vmul.f32 %v335, %v335
    %v419 = vmul.f32 %v338, %v338
    %v420 = vmul.f32 %v343, %v343
    %v421 = vmul.f32 %v346, %v346
    %v422 = vadd.f32 %v390, %v391
    %v423 = vadd.f32 %v422, %v392
    %v424 = vadd.f32 %v423, %v393
    %v425 = vadd.f32 %v424, %v394
    %v426 = vadd.f32 %v425, %v395
    %v427 = vadd.f32 %v426, %v396
    %v428 = vadd.f32 %v427, %v397
    %v429 = vadd.f32 %v428, %v398
    %v430 = vadd.f32 %v429, %v399
    %v431 = vadd.f32 %v430, %v400
    %v432 = vadd.f32 %v431, %v401
    %v433 = vadd.f32 %v432, %v402
    %v434 = vadd.f32 %v433, %v403
    %v435 = vadd.f32 %v434, %v404
    %v436 = vadd.f32 %v435, %v405
    %v437 = vadd.f32 %v436, %v406
    %v438 = vadd.f32 %v437, %v407
    %v439 = vadd.f32 %v438, %v408
    %v440 = vadd.f32 %v439, %v409
    %v441 = vadd.f32 %v440, %v410
    %v442 = vadd.f32 %v441, %v411
    %v443 = vadd.f32 %v442, %v412
    %v444 = vadd.f32 %v443, %v413
    %v445 = vadd.f32 %v444, %v414
    %v446 = vadd.f32 %v445, %v415
    %v447 = vadd.f32 %v446, %v416
    %v448 = vadd.f32 %v447, %v417
    %v449 = vadd.f32 %v448, %v418
    %v450 = vadd.f32 %v449, %v419
    %v451 = vadd.f32 %v450, %v420
    %v452 = vadd.f32 %v451, %v421
    %v453 = vrot.slane %v452, 4
    %v454 = vadd.f32 %v452, %v453
    %v455 = vrot.slane %v454, 2
    %v456 = vadd.f32 %v454, %v455
    %v457 = vrot.slane %v456, 1
    %v458 = vadd.f32 %v456, %v457
    %v459 = vadd.f32 %v389, %v458
    %460 = vst [vmem:[#allocation4] sm:$0x1] %v459
    // Predicated region
    $region14: #{tpu_custom_call.1} parent=1 // pred_check
      _
    $region15: #{tpu_custom_call.1} parent=1 // pred_check_branch
      %462 = sbr.rel (0) target = $region17
    $region16: #{tpu_custom_call.1} parent=1 // pred_region
      %s464 = ssub.s32 16, 16
      %465 = vsyncadd [#allocation3], %s464
      %s467 = sshll.u32 [#allocation2], 4
      %s468 = int_to_ptr.vmem [resolvable:$true] %s467
      %470 = dma.vmem_to_hbm [thread:$0]  %s468, 16, %s2, [#allocation3]
    $region17: #{tpu_custom_call.1} parent=1 // pred_fallthru
      _
    // Predicated region
    $region18: #{tpu_custom_call.1} parent=1 // pred_check
      _
    $region19: #{tpu_custom_call.1} parent=1 // pred_check_branch
      %472 = sbr.rel (0) target = $region21
    $region20: #{tpu_custom_call.1} parent=1 // pred_region
      %s474 = ssub.s32 16, 16
      %475 = vsyncadd [#allocation5], %s474
      %s477 = sshll.u32 [#allocation4], 4
      %s478 = int_to_ptr.vmem [resolvable:$true] %s477
      %480 = dma.vmem_to_hbm [thread:$0]  %s478, 16, %s3, [#allocation5]
    $region21: #{tpu_custom_call.1} parent=1 // pred_fallthru
      _
    // Predicated region
    $region22: #{tpu_custom_call.1} parent=1 // pred_check
      _
    $region23: #{tpu_custom_call.1} parent=1 // pred_check_branch
      %482 = sbr.rel (0) target = $region25
    $region24: #{tpu_custom_call.1} parent=1 // pred_region
      %483 = dma.done [#allocation3], 16
    $region25: #{tpu_custom_call.1} parent=1 // pred_fallthru
      _
    // Predicated region
    $region26: #{tpu_custom_call.1} parent=1 // pred_check
      _
    $region27: #{tpu_custom_call.1} parent=1 // pred_check_branch
      %485 = sbr.rel (0) target = $region29
    $region28: #{tpu_custom_call.1} parent=1 // pred_region
      %486 = dma.done [#allocation5], 16
    $region29: #{tpu_custom_call.1} parent=1 // pred_fallthru
      _
    %487 = vsyncpa [#allocation3], 1
    %488 = vsyncpa [#allocation5], 1

</llo_original>
